<compile_context>
chip_gen: v6e
topology: v6e:2x2x1
jax: 0.10.0
libtpu: 0.0.40
codegen_flags: <defaults>
</compile_context>

<pallas_src>
import functools
import math

import jax
import jax.numpy as jnp
from jax import lax
from jax.experimental import pallas as pl
from jax.experimental.pallas import tpu as pltpu


EPS = 1e-5              # torch.nn.InstanceNorm2d default
_LANE = 128
_CPACK = 16             # bf16 sublane packing: pad C so sublane stacking is tile aligned


def _scoped_vmem_limit():
    # v5e/v6e: 128 MiB VMEM per core, v7x: 64 MiB.  Stay well below the
    # physical size so the pipeline's double buffers always fit.
    phys = 64 * 1024 * 1024
    try:
        p = int(pltpu.get_tpu_info().vmem_capacity_bytes)
        if p > 0:
            phys = p
    except Exception:
        pass
    return min((3 * phys) // 4, 96 * 1024 * 1024)


_VMEM_LIMIT = _scoped_vmem_limit()
_TILE_BUDGET = min(_VMEM_LIMIT // 3, 16 * 1024 * 1024)


def _conv_stats_kernel(*refs, offs, TS, split_halo):
    """Pass 1: conv as ONE (OCp, KK*Cp) x (KK*Cp, TS) MXU dot + masked stats.

    refs (split_halo=True):  xm (1,Cp,TS), xh (1,1,Cp,HALO), w (OCp,KK*Cp),
                             mask (1,1,TS), y (1,OCp,TS) bf16, st (1,1,OCp,2)
    refs (split_halo=False): xm (1,Cp,TS+HALO), w, mask, y, st
    """
    if split_halo:
        xm_ref, xh_ref, w_ref, mask_ref, y_ref, st_ref = refs
        # Main block is lane-aligned (TS % 128 == 0); halo is the tiny tail.
        window = jnp.concatenate([xm_ref[0], xh_ref[0, 0]], axis=-1)   # (Cp, TS+HALO)
    else:
        xm_ref, w_ref, mask_ref, y_ref, st_ref = refs
        window = xm_ref[0]                                             # (Cp, TS+HALO)

    # Stack the K*K lane-shifted views along the contraction (sublane) axis so
    # the whole conv is a single large-contraction MXU matmul (no per-tap f32
    # partial-sum adds, single result drain).
    xs = jnp.concatenate([window[:, off:off + TS] for off in offs], axis=0)   # (KK*Cp, TS)
    acc = jnp.dot(w_ref[...], xs, preferred_element_type=jnp.float32)         # (OCp, TS)

    y_ref[0] = acc.astype(y_ref.dtype)

    # Precomputed {0,1} mask (wrapped columns + ragged-tile pad rows) replaces
    # the per-element iota/mod/select of the previous version.
    yv = acc * mask_ref[0]                                                    # (OCp, TS)
    st_ref[0, 0] = jnp.concatenate(
        [jnp.sum(yv, axis=1, keepdims=True),
         jnp.sum(yv * yv, axis=1, keepdims=True)], axis=1)                    # (OCp, 2)


def _norm_relu_kernel(y_ref, scale_ref, shift_ref, o_ref):
    """Pass 2: out = max(y * scale + shift, 0) with per-(n, c) scale/shift."""
    y = y_ref[0].astype(jnp.float32)
    o_ref[0] = jnp.maximum(y * scale_ref[0] + shift_ref[0], 0.0)


def _pick_row_tile(OH, Wp, CP, OCp, KK, HALO):
    """Row-tile height: whole image if it fits the per-step VMEM budget,
    otherwise the largest lane-aligned (TR*Wp % 128 == 0) multiple that does.
    Never silently degrades to an un-tiled whole image that blows VMEM."""
    def step_bytes(tr):
        ts = tr * Wp
        io = 2 * (CP * ts * 2 + OCp * ts * 2 + ts * 4 + CP * HALO * 2 + OCp * 8)
        tmp = KK * CP * ts * 2 + CP * (ts + HALO) * 2 + 2 * OCp * ts * 4
        return io + tmp + 2 * KK * OCp * CP * 2

    if step_bytes(OH) <= _TILE_BUDGET:
        return OH
    step = _LANE // math.gcd(Wp, _LANE)      # smallest TR with (TR*Wp) % 128 == 0
    tr = step
    while tr + step < OH and step_bytes(tr + step) <= _TILE_BUDGET:
        tr += step
    # Pathological shapes where even one aligned chunk exceeds the budget still
    # return a single aligned chunk (correctness over the budget heuristic).
    return tr


@functools.partial(jax.jit, static_argnames=("kernel_size", "stride", "row_tile"))
def conv_inst_relu(x_nchw, weight, bias, gamma, beta, *, kernel_size, stride,
                   row_tile=None):
    """Forward pass matching ConvInstRelu (NCHW in / NCHW out, f32 output)."""
    del bias  # exactly cancelled by the instance-norm mean subtraction
    if stride != 1:
        # TODO(synk): stride > 1 needs a per-tap strided gather; only the stride=1 path is lowered.
        raise NotImplementedError("Pallas ConvInstRelu currently supports stride=1 only")

    N, C, H, W = x_nchw.shape
    OC = weight.shape[0]
    K = kernel_size
    pad = K // 2
    Hp, Wp = H + 2 * pad, W + 2 * pad
    OH, OW = Hp - K + 1, Wp - K + 1
    KK = K * K
    OCp = -(-OC // 8) * 8                       # sublane-aligned output channels
    CP = -(-C // _CPACK) * _CPACK               # packing-aligned input channels
    HALO = max((K - 1) * (Wp + 1), 1)           # extra lanes each tile reads
    offs = tuple(di * Wp + dj for di in range(K) for dj in range(K))

    TR = row_tile if row_tile is not None else _pick_row_tile(OH, Wp, CP, OCp, KK, HALO)
    n_tiles = -(-OH // TR)
    if n_tiles > 1 and (TR * Wp) % _LANE != 0:
        raise ValueError("row_tile * padded_width must be a multiple of 128 when tiling")
    TS = TR * Wp                                # flattened lanes per row tile
    R = n_tiles * TR                            # (padded) output rows
    LOUT = R * Wp                               # y / out plane length
    ext_len = LOUT + HALO

    # ---- glue: reflect pad + channel pad + bf16 + flatten + tail pad ---------
    xp = jnp.pad(x_nchw, ((0, 0), (0, 0), (pad, pad), (pad, pad)), mode="reflect")
    xp = jnp.pad(xp, ((0, 0), (0, CP - C), (0, 0), (0, 0)))
    xp = xp.astype(jnp.bfloat16).reshape(N, CP, Hp * Wp)
    ext = jnp.pad(xp, ((0, 0), (0, 0), (0, ext_len - Hp * Wp)))        # (N, CP, ext_len)

    # Weights: (OC, C, K, K) -> (OCp, KK*CP), tap-major columns, bf16.
    wt = jnp.transpose(weight, (0, 2, 3, 1)).astype(jnp.float32)       # (OC, K, K, C)
    w_full = jnp.zeros((OCp, K, K, CP), jnp.float32).at[:OC, :, :, :C].set(wt)
    w2 = w_full.reshape(OCp, KK * CP).astype(jnp.bfloat16)

    # Per-tile {0,1} validity mask: drops width-wrapped columns and (for a
    # ragged last tile) padded rows from the instance-norm statistics.
    lane = jnp.arange(TS, dtype=jnp.int32)
    col_ok = (lane % Wp) < OW
    row = jnp.arange(n_tiles, dtype=jnp.int32)[:, None] * TR + (lane // Wp)[None, :]
    mask = (col_ok[None, :] & (row < OH)).astype(jnp.float32).reshape(n_tiles, 1, TS)

    split_halo = n_tiles > 1
    if split_halo:
        # Non-overlapping lane-aligned main blocks straight from the padded
        # plane (no duplicated im2col / halo staging array), plus a tiny
        # per-tile halo gathered separately.
        x_main = ext[:, :, :LOUT]                                       # (N, CP, LOUT)
        x_halo = jnp.stack(
            [ext[:, :, (j + 1) * TS:(j + 1) * TS + HALO] for j in range(n_tiles)],
            axis=1)                                                     # (N, n_tiles, CP, HALO)
        inputs = (x_main, x_halo, w2, mask)
        in_specs = [
            pl.BlockSpec((1, CP, TS), lambda n, j: (n, 0, j)),
            pl.BlockSpec((1, 1, CP, HALO), lambda n, j: (n, j, 0, 0)),
            pl.BlockSpec((OCp, KK * CP), lambda n, j: (0, 0)),
            pl.BlockSpec((1, 1, TS), lambda n, j: (j, 0, 0)),
        ]
    else:
        inputs = (ext, w2, mask)
        in_specs = [
            pl.BlockSpec((1, CP, ext_len), lambda n, j: (n, 0, 0)),
            pl.BlockSpec((OCp, KK * CP), lambda n, j: (0, 0)),
            pl.BlockSpec((1, 1, TS), lambda n, j: (j, 0, 0)),
        ]

    # ---- pass 1: conv (single big-contraction dot) + streamed statistics -----
    kern1 = functools.partial(_conv_stats_kernel, offs=offs, TS=TS,
                              split_halo=split_halo)
    y, stats = pl.pallas_call(
        kern1,
        grid=(N, n_tiles),
        in_specs=in_specs,
        out_specs=[
            pl.BlockSpec((1, OCp, TS), lambda n, j: (n, 0, j)),
            pl.BlockSpec((1, 1, OCp, 2), lambda n, j: (n, j, 0, 0)),
        ],
        out_shape=[
            jax.ShapeDtypeStruct((N, OCp, LOUT), jnp.bfloat16),   # bf16 intermediate
            jax.ShapeDtypeStruct((N, n_tiles, OCp, 2), jnp.float32),
        ],
        compiler_params=pltpu.CompilerParams(
            dimension_semantics=("parallel", "parallel"),
            vmem_limit_bytes=_VMEM_LIMIT,
        ),
    )(*inputs)

    # ---- tiny epilogue: fold stats into per-(n, c) scale / shift --------------
    s = jnp.sum(stats, axis=1)                                   # (N, OCp, 2)
    cnt = jnp.float32(OH * OW)
    mean = s[..., 0] / cnt
    # NOTE: E[x^2] - E[x]^2 in f32 is adequate for conv activations of moderate
    # dynamic range.
    # TODO(synk): switch to mean-shifted accumulation if activations can have |mean| >> std.
    var = jnp.maximum(s[..., 1] / cnt - mean * mean, 0.0)
    gamma_p = jnp.zeros((OCp,), jnp.float32).at[:OC].set(gamma.astype(jnp.float32))
    beta_p = jnp.zeros((OCp,), jnp.float32).at[:OC].set(beta.astype(jnp.float32))
    rs = lax.rsqrt(var + EPS)
    scale = (gamma_p * rs)[..., None]                            # (N, OCp, 1)
    shift = (beta_p - mean * gamma_p * rs)[..., None]            # (N, OCp, 1)

    # ---- pass 2: normalize + ReLU over the bf16 conv output -------------------
    out_full = pl.pallas_call(
        _norm_relu_kernel,
        grid=(N, n_tiles),
        in_specs=[
            pl.BlockSpec((1, OCp, TS), lambda n, j: (n, 0, j)),
            pl.BlockSpec((1, OCp, 1), lambda n, j: (n, 0, 0)),
            pl.BlockSpec((1, OCp, 1), lambda n, j: (n, 0, 0)),
        ],
        out_specs=pl.BlockSpec((1, OCp, TS), lambda n, j: (n, 0, j)),
        out_shape=jax.ShapeDtypeStruct((N, OCp, LOUT), jnp.float32),
        compiler_params=pltpu.CompilerParams(
            dimension_semantics=("parallel", "parallel"),
            vmem_limit_bytes=_VMEM_LIMIT,
        ),
    )(y, scale, shift)

    # TODO(synk): emitting the compact (OH, OW) output straight from pass 2 needs an
    # in-kernel lane compaction (Wp -> OW per row); a single strided XLA slice is used instead.
    out = out_full.reshape(N, OCp, R, Wp)[:, :OC, :OH, :OW]
    return out


def _reference(x_nchw, weight, bias, gamma, beta, *, kernel_size, stride):
    """Pure-JAX reference with exact module semantics (bias included)."""
    K = kernel_size
    pad = K // 2
    x_pad = jnp.pad(x_nchw, ((0, 0), (0, 0), (pad, pad), (pad, pad)), mode="reflect")
    y = lax.conv_general_dilated(
        x_pad, weight, window_strides=(stride, stride), padding="VALID",
        dimension_numbers=("NCHW", "OIHW", "NCHW"),
    ) + bias.reshape(1, -1, 1, 1)
    mean = jnp.mean(y, axis=(2, 3), keepdims=True)
    var = jnp.var(y, axis=(2, 3), keepdims=True)
    y = (y - mean) * lax.rsqrt(var + EPS)
    y = y * gamma.reshape(1, -1, 1, 1) + beta.reshape(1, -1, 1, 1)
    return jnp.maximum(y, 0.0)


def _check(x, weight, bias, gamma, beta, K, *, row_tile=None):
    out = conv_inst_relu(x, weight, bias, gamma, beta,
                         kernel_size=K, stride=1, row_tile=row_tile)
    out = jax.block_until_ready(out)

    ref_exact = _reference(x, weight, bias, gamma, beta, kernel_size=K, stride=1)
    x_b = x.astype(jnp.bfloat16).astype(jnp.float32)
    w_b = weight.astype(jnp.bfloat16).astype(jnp.float32)
    ref_bf16 = _reference(x_b, w_b, bias, gamma, beta, kernel_size=K, stride=1)

    assert out.shape == ref_exact.shape
    err_b = float(jnp.max(jnp.abs(out - ref_bf16)))
    err_e = float(jnp.max(jnp.abs(out - ref_exact)))
    # The kernel additionally rounds the conv intermediate to bf16, so the
    # comparison against the bf16-consistent reference uses a matching budget.
    assert err_b < 3e-2, f"mismatch vs bf16-consistent reference: {err_b}"
    assert err_e < 1.5e-1, f"mismatch vs f32 reference: {err_e}"


if __name__ == "__main__":
    key = jax.random.PRNGKey(0)
    kx, kw, kb, kg, kbt, kx2 = jax.random.split(key, 6)

    N, C, OC, K = 2, 4, 8, 3
    weight = 0.1 * jax.random.normal(kw, (OC, C, K, K), dtype=jnp.float32)
    bias = 0.1 * jax.random.normal(kb, (OC,), dtype=jnp.float32)
    gamma = 1.0 + 0.1 * jax.random.normal(kg, (OC,), dtype=jnp.float32)
    beta = 0.1 * jax.random.normal(kbt, (OC,), dtype=jnp.float32)

    # 1) Small default case (single lane-dense tile path).
    x1 = jax.random.normal(kx, (N, C, 16, 16), dtype=jnp.float32)
    _check(x1, weight, bias, gamma, beta, K)

    # 2) Forced multi-tile case with a ragged last tile (exercises the
    #    lane-aligned main blocks + tiny halo blocks + per-tile mask path).
    x2 = jax.random.normal(kx2, (N, C, 30, 30), dtype=jnp.float32)
    _check(x2, weight, bias, gamma, beta, K, row_tile=8)

    print("KERNEL_OK")
</pallas_src>

<mosaic_0001>
module attributes {stable_mosaic.version = 11 : i64} {
  func.func @_conv_stats_kernel(%arg0: i32, %arg1: i32, %arg2: memref<1x16x326xbf16, #tpu.memory_space<vmem>>, %arg3: memref<8x144xbf16, #tpu.memory_space<vmem>>, %arg4: memref<1x1x288xf32, #tpu.memory_space<vmem>>, %arg5: memref<1x8x288xbf16, #tpu.memory_space<vmem>>, %arg6: memref<1x1x8x2xf32, #tpu.memory_space<vmem>>) attributes {dimension_semantics = [#tpu.dimension_semantics<parallel>, #tpu.dimension_semantics<parallel>], iteration_bounds = array<i64: 2, 1>, scalar_prefetch = 0 : i64, scratch_operands = 0 : i64, tpu.core_type = #tpu.core_type<tc>, window_params = [{transform_indices = @transform_0, window_bounds = array<i64: 1, 16, 326>}, {pipeline_mode = #tpu.pipeline_mode<synchronous>, transform_indices = @transform_1, window_bounds = array<i64: 8, 144>}, {transform_indices = @transform_2, window_bounds = array<i64: 1, 1, 288>}, {transform_indices = @transform_3, window_bounds = array<i64: 1, 8, 288>}, {transform_indices = @transform_4, window_bounds = array<i64: 1, 1, 8, 2>}]} {
    %c0 = arith.constant 0 : index
    %c0_0 = arith.constant 0 : index
    %c0_1 = arith.constant 0 : index
    %0 = vector.load %arg2[%c0, %c0_0, %c0_1] : memref<1x16x326xbf16, #tpu.memory_space<vmem>>, vector<1x16x326xbf16>
    %1 = vector.shape_cast %0 : vector<1x16x326xbf16> to vector<16x326xbf16>
    %2 = vector.extract_strided_slice %1 {offsets = [0, 0], sizes = [16, 288], strides = [1, 1]} : vector<16x326xbf16> to vector<16x288xbf16>
    %3 = vector.extract_strided_slice %1 {offsets = [0, 1], sizes = [16, 288], strides = [1, 1]} : vector<16x326xbf16> to vector<16x288xbf16>
    %4 = vector.extract_strided_slice %1 {offsets = [0, 2], sizes = [16, 288], strides = [1, 1]} : vector<16x326xbf16> to vector<16x288xbf16>
    %5 = vector.extract_strided_slice %1 {offsets = [0, 18], sizes = [16, 288], strides = [1, 1]} : vector<16x326xbf16> to vector<16x288xbf16>
    %6 = vector.extract_strided_slice %1 {offsets = [0, 19], sizes = [16, 288], strides = [1, 1]} : vector<16x326xbf16> to vector<16x288xbf16>
    %7 = vector.extract_strided_slice %1 {offsets = [0, 20], sizes = [16, 288], strides = [1, 1]} : vector<16x326xbf16> to vector<16x288xbf16>
    %8 = vector.extract_strided_slice %1 {offsets = [0, 36], sizes = [16, 288], strides = [1, 1]} : vector<16x326xbf16> to vector<16x288xbf16>
    %9 = vector.extract_strided_slice %1 {offsets = [0, 37], sizes = [16, 288], strides = [1, 1]} : vector<16x326xbf16> to vector<16x288xbf16>
    %10 = vector.extract_strided_slice %1 {offsets = [0, 38], sizes = [16, 288], strides = [1, 1]} : vector<16x326xbf16> to vector<16x288xbf16>
    %11 = tpu.concatenate %2, %3, %4, %5, %6, %7, %8, %9, %10 in 0 : vector<16x288xbf16>, vector<16x288xbf16>, vector<16x288xbf16>, vector<16x288xbf16>, vector<16x288xbf16>, vector<16x288xbf16>, vector<16x288xbf16>, vector<16x288xbf16>, vector<16x288xbf16> -> vector<144x288xbf16>
    %c0_2 = arith.constant 0 : index
    %c0_3 = arith.constant 0 : index
    %12 = vector.load %arg3[%c0_2, %c0_3] : memref<8x144xbf16, #tpu.memory_space<vmem>>, vector<8x144xbf16>
    %cst = arith.constant dense<0.000000e+00> : vector<8x288xf32>
    %13 = tpu.matmul %12, %11, %cst {dimension_numbers = #tpu.dot_dimension_numbers<[1], [0], [0], [1], [0, 0, 1, 1], [], []>} : vector<8x144xbf16>, vector<144x288xbf16>, vector<8x288xf32> -> vector<8x288xf32>
    %14 = arith.truncf %13 : vector<8x288xf32> to vector<8x288xbf16>
    %c0_4 = arith.constant 0 : index
    %c0_5 = arith.constant 0 : index
    %c0_6 = arith.constant 0 : index
    %15 = vector.load %arg5[%c0_4, %c0_5, %c0_6] : memref<1x8x288xbf16, #tpu.memory_space<vmem>>, vector<1x8x288xbf16>
    %16 = vector.shape_cast %15 : vector<1x8x288xbf16> to vector<8x288xbf16>
    %17 = vector.shape_cast %14 : vector<8x288xbf16> to vector<1x8x288xbf16>
    tpu.vector_store %arg5[%c0_4, %c0_5, %c0_6], %17 {strides = array<i32>} : memref<1x8x288xbf16, #tpu.memory_space<vmem>>, vector<1x8x288xbf16>,
    %c0_7 = arith.constant 0 : index
    %c0_8 = arith.constant 0 : index
    %c0_9 = arith.constant 0 : index
    %18 = vector.load %arg4[%c0_7, %c0_8, %c0_9] : memref<1x1x288xf32, #tpu.memory_space<vmem>>, vector<1x1x288xf32>
    %19 = vector.shape_cast %18 : vector<1x1x288xf32> to vector<1x288xf32>
    %20 = vector.broadcast %19 : vector<1x288xf32> to vector<8x288xf32>
    %21 = arith.mulf %13, %20 : vector<8x288xf32>
    %cst_10 = arith.constant dense<0.000000e+00> : vector<8xf32>
    %22 = vector.multi_reduction <add>, %21, %cst_10 [1] : vector<8x288xf32> to vector<8xf32>
    %23 = vector.shape_cast %22 : vector<8xf32> to vector<8x1xf32>
    %24 = arith.mulf %21, %21 : vector<8x288xf32>
    %cst_11 = arith.constant dense<0.000000e+00> : vector<8xf32>
    %25 = vector.multi_reduction <add>, %24, %cst_11 [1] : vector<8x288xf32> to vector<8xf32>
    %26 = vector.shape_cast %25 : vector<8xf32> to vector<8x1xf32>
    %27 = tpu.concatenate %23, %26 in 1 : vector<8x1xf32>, vector<8x1xf32> -> vector<8x2xf32>
    %c0_12 = arith.constant 0 : index
    %c0_13 = arith.constant 0 : index
    %c0_14 = arith.constant 0 : index
    %c0_15 = arith.constant 0 : index
    %28 = vector.load %arg6[%c0_12, %c0_13, %c0_14, %c0_15] : memref<1x1x8x2xf32, #tpu.memory_space<vmem>>, vector<1x1x8x2xf32>
    %29 = vector.shape_cast %28 : vector<1x1x8x2xf32> to vector<8x2xf32>
    %30 = vector.shape_cast %27 : vector<8x2xf32> to vector<1x1x8x2xf32>
    tpu.vector_store %arg6[%c0_12, %c0_13, %c0_14, %c0_15], %30 {strides = array<i32>} : memref<1x1x8x2xf32, #tpu.memory_space<vmem>>, vector<1x1x8x2xf32>,
    return
  }
  func.func @transform_0(%arg0: i32, %arg1: i32) -> (i32, i32, i32) {
    %c0_i32 = arith.constant 0 : i32
    %c0_i32_0 = arith.constant 0 : i32
    %c0_i32_1 = arith.constant 0 : i32
    return %arg0, %c0_i32, %c0_i32_0 : i32, i32, i32
  }
  func.func @transform_1(%arg0: i32, %arg1: i32) -> (i32, i32) {
    %c0_i32 = arith.constant 0 : i32
    %c0_i32_0 = arith.constant 0 : i32
    %c0_i32_1 = arith.constant 0 : i32
    return %c0_i32, %c0_i32_0 : i32, i32
  }
  func.func @transform_2(%arg0: i32, %arg1: i32) -> (i32, i32, i32) {
    %c0_i32 = arith.constant 0 : i32
    %c0_i32_0 = arith.constant 0 : i32
    %c0_i32_1 = arith.constant 0 : i32
    return %arg1, %c0_i32, %c0_i32_0 : i32, i32, i32
  }
  func.func @transform_3(%arg0: i32, %arg1: i32) -> (i32, i32, i32) {
    %c0_i32 = arith.constant 0 : i32
    %c0_i32_0 = arith.constant 0 : i32
    return %arg0, %c0_i32, %arg1 : i32, i32, i32
  }
  func.func @transform_4(%arg0: i32, %arg1: i32) -> (i32, i32, i32, i32) {
    %c0_i32 = arith.constant 0 : i32
    %c0_i32_0 = arith.constant 0 : i32
    %c0_i32_1 = arith.constant 0 : i32
    return %arg0, %arg1, %c0_i32, %c0_i32_0 : i32, i32, i32, i32
  }
}

module attributes {stable_mosaic.version = 11 : i64} {
  func.func @_norm_relu_kernel(%arg0: i32, %arg1: i32, %arg2: memref<1x8x288xbf16, #tpu.memory_space<vmem>>, %arg3: memref<1x8x1xf32, #tpu.memory_space<vmem>>, %arg4: memref<1x8x1xf32, #tpu.memory_space<vmem>>, %arg5: memref<1x8x288xf32, #tpu.memory_space<vmem>>) attributes {dimension_semantics = [#tpu.dimension_semantics<parallel>, #tpu.dimension_semantics<parallel>], iteration_bounds = array<i64: 2, 1>, scalar_prefetch = 0 : i64, scratch_operands = 0 : i64, tpu.core_type = #tpu.core_type<tc>, window_params = [{transform_indices = @transform_0, window_bounds = array<i64: 1, 8, 288>}, {transform_indices = @transform_1, window_bounds = array<i64: 1, 8, 1>}, {transform_indices = @transform_2, window_bounds = array<i64: 1, 8, 1>}, {transform_indices = @transform_3, window_bounds = array<i64: 1, 8, 288>}]} {
    %c0 = arith.constant 0 : index
    %c0_0 = arith.constant 0 : index
    %c0_1 = arith.constant 0 : index
    %0 = vector.load %arg2[%c0, %c0_0, %c0_1] : memref<1x8x288xbf16, #tpu.memory_space<vmem>>, vector<1x8x288xbf16>
    %1 = vector.shape_cast %0 : vector<1x8x288xbf16> to vector<8x288xbf16>
    %2 = arith.extf %1 : vector<8x288xbf16> to vector<8x288xf32>
    %c0_2 = arith.constant 0 : index
    %c0_3 = arith.constant 0 : index
    %c0_4 = arith.constant 0 : index
    %3 = vector.load %arg3[%c0_2, %c0_3, %c0_4] : memref<1x8x1xf32, #tpu.memory_space<vmem>>, vector<1x8x1xf32>
    %4 = vector.shape_cast %3 : vector<1x8x1xf32> to vector<8x1xf32>
    %5 = vector.broadcast %4 : vector<8x1xf32> to vector<8x288xf32>
    %6 = arith.mulf %2, %5 : vector<8x288xf32>
    %c0_5 = arith.constant 0 : index
    %c0_6 = arith.constant 0 : index
    %c0_7 = arith.constant 0 : index
    %7 = vector.load %arg4[%c0_5, %c0_6, %c0_7] : memref<1x8x1xf32, #tpu.memory_space<vmem>>, vector<1x8x1xf32>
    %8 = vector.shape_cast %7 : vector<1x8x1xf32> to vector<8x1xf32>
    %9 = vector.broadcast %8 : vector<8x1xf32> to vector<8x288xf32>
    %10 = arith.addf %6, %9 : vector<8x288xf32>
    %cst = arith.constant 0.000000e+00 : f32
    %11 = vector.broadcast %cst : f32 to vector<8x288xf32>
    %12 = arith.maximumf %10, %11 : vector<8x288xf32>
    %c0_8 = arith.constant 0 : index
    %c0_9 = arith.constant 0 : index
    %c0_10 = arith.constant 0 : index
    %13 = vector.load %arg5[%c0_8, %c0_9, %c0_10] : memref<1x8x288xf32, #tpu.memory_space<vmem>>, vector<1x8x288xf32>
    %14 = vector.shape_cast %13 : vector<1x8x288xf32> to vector<8x288xf32>
    %15 = vector.shape_cast %12 : vector<8x288xf32> to vector<1x8x288xf32>
    tpu.vector_store %arg5[%c0_8, %c0_9, %c0_10], %15 {strides = array<i32>} : memref<1x8x288xf32, #tpu.memory_space<vmem>>, vector<1x8x288xf32>,
    return
  }
  func.func @transform_0(%arg0: i32, %arg1: i32) -> (i32, i32, i32) {
    %c0_i32 = arith.constant 0 : i32
    %c0_i32_0 = arith.constant 0 : i32
    return %arg0, %c0_i32, %arg1 : i32, i32, i32
  }
  func.func @transform_1(%arg0: i32, %arg1: i32) -> (i32, i32, i32) {
    %c0_i32 = arith.constant 0 : i32
    %c0_i32_0 = arith.constant 0 : i32
    %c0_i32_1 = arith.constant 0 : i32
    return %arg0, %c0_i32, %c0_i32_0 : i32, i32, i32
  }
  func.func @transform_2(%arg0: i32, %arg1: i32) -> (i32, i32, i32) {
    %c0_i32 = arith.constant 0 : i32
    %c0_i32_0 = arith.constant 0 : i32
    %c0_i32_1 = arith.constant 0 : i32
    return %arg0, %c0_i32, %c0_i32_0 : i32, i32, i32
  }
  func.func @transform_3(%arg0: i32, %arg1: i32) -> (i32, i32, i32) {
    %c0_i32 = arith.constant 0 : i32
    %c0_i32_0 = arith.constant 0 : i32
    return %arg0, %c0_i32, %arg1 : i32, i32, i32
  }
}

</mosaic_0001>

<llo_original>
// kernel: conv_inst_relu.3
$region0: #{conv_inst_relu.3}
  #allocation0 [shape = 'u32[]', space=smem, size = 0x4, offset = 0x4, fixed_abs, tag = 'smem constant byte address 0x4 - core index']
  #allocation1 [shape = 'u32[144,128]{1,0:T(1,128)}', space=vmem, size = 0x12000, scoped, tag = 'internal scratch']
  %s0 = inlined_call_operand.vmem [shape: bf16[2,8,288], index: 0, kind: input, shape index: {}]
  %s1 = inlined_call_operand.vmem [shape: f32[2,8,1], index: 1, kind: input, shape index: {}]
  %s2 = inlined_call_operand.vmem [shape: f32[2,8,1], index: 2, kind: input, shape index: {}]
  %s3 = inlined_call_operand.vmem [shape: f32[2,8,288], index: 3, kind: output, shape index: {}]
  %s4 = sld [smem:[#allocation0]]
  $region45: #{conv_inst_relu.3} parent=0
    _
  %s6 = ssub.s32 1, %s4
  %s7 = scalar_select 0, %s6, %s4
  loop: start=0, step=1, limit=4
  $region2: #{conv_inst_relu.3} parent=0 // loop_pre_header
    _
  $region3: #{conv_inst_relu.3} parent=0 // loop_header
    %s9 = sphi 0, %s13
    %p10 = scmp.ge.s32.totalorder %s9, 4
    %s16 = sphi 0, %s28
    %s17 = sphi 0, %s24
    %s18 = sphi 0, %s16
    %s19 = sphi 0, %s17
    %s20 = sphi 0, %s18
    %s21 = sphi 0, %s19
    %s33 = sphi 0, %s35
    %s36 = sphi 0, %s33
    %s37 = sphi 0, %s36
    %s53 = sphi 0, %s37
    %s59 = sphi 0, %s61
    %s62 = sphi 0, %s59
    %s63 = sphi 0, %s62
    %s79 = sphi 0, %s63
    %s85 = sphi 0, %s87
    %s88 = sphi 0, %s85
    %s89 = sphi 0, %s88
    %s105 = sphi 0, %s89
    %s113 = sphi 0, %s115
    %s116 = sphi 0, %s113
    %s117 = sphi 0, %s116
    %s133 = sphi 0, %s117
  $region4: #{conv_inst_relu.3} parent=0 // loop_header_branch
    %12 = sbr.rel (%p10) target = $region8
  $region5: #{conv_inst_relu.3} parent=0 // loop_body
    %s14 = ssub.s32 %s9, 1
    %s15 = ssub.s32 %s9, 2
    %s22 = sadd.s32 1, %s17
    %p23 = scmp.ge.s32.totalorder %s22, 1
    %s24 = scalar_select %p23, 0, %s22
    %s25 = sadd.s32 1, %s16
    %s26 = scalar_select %p23, %s25, %s16
    %p27 = scmp.ge.s32.totalorder %s26, 2
    %s28 = scalar_select %p27, 0, %s26
    %s29 = ssub.s32 %s16, %s28
    %s30 = ssub.s32 %s17, %s24
    %s31 = sor.u32 %s29, %s30
    %p32 = scmp.eq.s32.totalorder %s31, 0
    %s34 = sadd.s32 %s33, 1
    %s35 = scalar_select %p32, %s33, %s34
    %p38 = pneg %p32
    %p39 = scmp.eq.s32.totalorder %s9, 1
    %p40 = por %p38, %p39
    %p41 = scmp.ne.s32.totalorder %s33, %s36
    %p42 = scmp.eq.s32.totalorder %s9, 0
    %p43 = por %p41, %p42
    %p44 = scmp.ne.s32.totalorder %s33, %s36
    %p45 = scmp.eq.s32.totalorder %s14, 1
    %p46 = por %p44, %p45
    %p47 = scmp.ne.s32.totalorder %s36, %s37
    %p48 = scmp.eq.s32.totalorder %s14, 0
    %p49 = por %p47, %p48
    %p50 = scmp.ne.s32.totalorder %s36, %s37
    %p51 = scmp.eq.s32.totalorder %s15, 1
    %p52 = por %p50, %p51
    %p54 = scmp.ne.s32.totalorder %s37, %s53
    %p55 = scmp.eq.s32.totalorder %s15, 0
    %p56 = por %p54, %p55
    %s57 = ssub.s32 %s16, %s28
    %p58 = scmp.eq.s32.totalorder %s57, 0
    %s60 = sadd.s32 %s59, 1
    %s61 = scalar_select %p58, %s59, %s60
    %p64 = pneg %p58
    %p65 = scmp.eq.s32.totalorder %s9, 1
    %p66 = por %p64, %p65
    %p67 = scmp.ne.s32.totalorder %s59, %s62
    %p68 = scmp.eq.s32.totalorder %s9, 0
    %p69 = por %p67, %p68
    %p70 = scmp.ne.s32.totalorder %s59, %s62
    %p71 = scmp.eq.s32.totalorder %s14, 1
    %p72 = por %p70, %p71
    %p73 = scmp.ne.s32.totalorder %s62, %s63
    %p74 = scmp.eq.s32.totalorder %s14, 0
    %p75 = por %p73, %p74
    %p76 = scmp.ne.s32.totalorder %s62, %s63
    %p77 = scmp.eq.s32.totalorder %s15, 1
    %p78 = por %p76, %p77
    %p80 = scmp.ne.s32.totalorder %s63, %s79
    %p81 = scmp.eq.s32.totalorder %s15, 0
    %p82 = por %p80, %p81
    %s83 = ssub.s32 %s16, %s28
    %p84 = scmp.eq.s32.totalorder %s83, 0
    %s86 = sadd.s32 %s85, 1
    %s87 = scalar_select %p84, %s85, %s86
    %p90 = pneg %p84
    %p91 = scmp.eq.s32.totalorder %s9, 1
    %p92 = por %p90, %p91
    %p93 = scmp.ne.s32.totalorder %s85, %s88
    %p94 = scmp.eq.s32.totalorder %s9, 0
    %p95 = por %p93, %p94
    %p96 = scmp.ne.s32.totalorder %s85, %s88
    %p97 = scmp.eq.s32.totalorder %s14, 1
    %p98 = por %p96, %p97
    %p99 = scmp.ne.s32.totalorder %s88, %s89
    %p100 = scmp.eq.s32.totalorder %s14, 0
    %p101 = por %p99, %p100
    %p102 = scmp.ne.s32.totalorder %s88, %s89
    %p103 = scmp.eq.s32.totalorder %s15, 1
    %p104 = por %p102, %p103
    %p106 = scmp.ne.s32.totalorder %s89, %s105
    %p107 = scmp.eq.s32.totalorder %s15, 0
    %p108 = por %p106, %p107
    %s109 = ssub.s32 %s16, %s28
    %s110 = ssub.s32 %s17, %s24
    %s111 = sor.u32 %s109, %s110
    %p112 = scmp.eq.s32.totalorder %s111, 0
    %s114 = sadd.s32 %s113, 1
    %s115 = scalar_select %p112, %s113, %s114
    %p118 = pneg %p112
    %p119 = scmp.eq.s32.totalorder %s9, 1
    %p120 = por %p118, %p119
    %p121 = scmp.ne.s32.totalorder %s113, %s116
    %p122 = scmp.eq.s32.totalorder %s9, 0
    %p123 = por %p121, %p122
    %p124 = scmp.ne.s32.totalorder %s113, %s116
    %p125 = scmp.eq.s32.totalorder %s14, 1
    %p126 = por %p124, %p125
    %p127 = scmp.ne.s32.totalorder %s116, %s117
    %p128 = scmp.eq.s32.totalorder %s14, 0
    %p129 = por %p127, %p128
    %p130 = scmp.ne.s32.totalorder %s116, %s117
    %p131 = scmp.eq.s32.totalorder %s15, 1
    %p132 = por %p130, %p131
    %p134 = scmp.ne.s32.totalorder %s117, %s133
    %p135 = scmp.eq.s32.totalorder %s15, 0
    %p136 = por %p134, %p135
    %p137 = scmp.le.s32.totalorder 1, %s9
    %p138 = scmp.lt.s32.totalorder %s9, 3
    %p139 = pnand %p137, %p138
    %p140 = pneg %p139
    // Predicated region
    $region9: #{conv_inst_relu.3} parent=5 // pred_check
      _
    $region10: #{conv_inst_relu.3} parent=5 // pred_check_branch
      %142 = sbr.rel (%p139) target = $region12
    $region11: #{conv_inst_relu.3} parent=5 // pred_region
      %s143 = ssub.s32 %s9, 1
    $region12: #{conv_inst_relu.3} parent=5 // pred_fallthru
      _
    %p144 = scmp.lt.s32.totalorder %s9, 2
    // Predicated region
    $region13: #{conv_inst_relu.3} parent=5 // pred_check
      %p145 = pneg %p144
    $region14: #{conv_inst_relu.3} parent=5 // pred_check_branch
      %147 = sbr.rel (%p145) target = $region16
    $region15: #{conv_inst_relu.3} parent=5 // pred_region
      // Predicated region
      $region17: #{conv_inst_relu.3} parent=15 // pred_check
        %p148 = pneg %p43
      $region18: #{conv_inst_relu.3} parent=15 // pred_check_branch
        %150 = sbr.rel (%p148) target = $region20
      $region19: #{conv_inst_relu.3} parent=15 // pred_region
        %s151 = smul.u32 3, %s17
        %p152 = scmp.lt.s32.totalorder %s16, 1
        %s153 = scalar_select %p152, %s16, 1
        %p154 = scmp.lt.s32.totalorder %s151, 2
        %s155 = scalar_select %p154, %s151, 2
        %s156 = smul.addr %s153, 3
        %s157 = sadd.s32 %s155, %s156
        %s158 = smul.addr %s157, 4
        %s159 = scalar_lea.vmem %s0, %s158
        %s160 = smul.u32 3, %s17
      $region20: #{conv_inst_relu.3} parent=15 // pred_fallthru
        _
      // Predicated region
      $region21: #{conv_inst_relu.3} parent=15 // pred_check
        %p161 = pneg %p69
      $region22: #{conv_inst_relu.3} parent=15 // pred_check_branch
        %163 = sbr.rel (%p161) target = $region24
      $region23: #{conv_inst_relu.3} parent=15 // pred_region
        %p164 = scmp.lt.s32.totalorder %s16, 1
        %s165 = scalar_select %p164, %s16, 1
        %s166 = smul.addr %s165, 8
        %s167 = scalar_lea.vmem %s1, %s166
      $region24: #{conv_inst_relu.3} parent=15 // pred_fallthru
        _
      // Predicated region
      $region25: #{conv_inst_relu.3} parent=15 // pred_check
        %p168 = pneg %p95
      $region26: #{conv_inst_relu.3} parent=15 // pred_check_branch
        %170 = sbr.rel (%p168) target = $region28
      $region27: #{conv_inst_relu.3} parent=15 // pred_region
        %p171 = scmp.lt.s32.totalorder %s16, 1
        %s172 = scalar_select %p171, %s16, 1
        %s173 = smul.addr %s172, 8
        %s174 = scalar_lea.vmem %s2, %s173
      $region28: #{conv_inst_relu.3} parent=15 // pred_fallthru
        _
    $region16: #{conv_inst_relu.3} parent=5 // pred_fallthru
      _
    %p175 = scmp.le.s32.totalorder 1, %s9
    %p176 = scmp.lt.s32.totalorder %s9, 3
    %p177 = pnand %p175, %p176
    %p178 = pneg %p177
    // Predicated region
    $region29: #{conv_inst_relu.3} parent=5 // pred_check
      _
    $region30: #{conv_inst_relu.3} parent=5 // pred_check_branch
      %180 = sbr.rel (%p177) target = $region32
    $region31: #{conv_inst_relu.3} parent=5 // pred_region
      %s181 = ssub.s32 %s9, 1
      %s182 = smul.u32 3, %s19
      %p183 = scmp.lt.s32.totalorder %s18, 1
      %s184 = scalar_select %p183, %s18, 1
      %p185 = scmp.lt.s32.totalorder %s182, 2
      %s186 = scalar_select %p185, %s182, 2
      %s187 = smul.addr %s184, 3
      %s188 = sadd.s32 %s186, %s187
      %s189 = smul.addr %s188, 4
      %s190 = scalar_lea.vmem %s0, %s189
      %p191 = pneg %p49
      %p192 = pneg %p46
      %p193 = scmp.lt.s32.totalorder %s18, 1
      %s194 = scalar_select %p193, %s18, 1
      %s195 = smul.addr %s194, 8
      %s196 = scalar_lea.vmem %s1, %s195
      %p197 = pneg %p75
      %p198 = pneg %p72
      %p199 = scmp.lt.s32.totalorder %s18, 1
      %s200 = scalar_select %p199, %s18, 1
      %s201 = smul.addr %s200, 8
      %s202 = scalar_lea.vmem %s2, %s201
      %p203 = pneg %p101
      %p204 = pneg %p98
      %p205 = pneg %p129
      %p206 = pneg %p126
      %s207 = smul.u32 3, %s19
      %p208 = scmp.lt.s32.totalorder %s18, 1
      %s209 = scalar_select %p208, %s18, 1
      %p210 = scmp.lt.s32.totalorder %s207, 2
      %s211 = scalar_select %p210, %s207, 2
      %s212 = smul.addr %s209, 3
      %s213 = sadd.s32 %s211, %s212
      %s214 = smul.addr %s213, 8
      %s215 = scalar_lea.vmem %s3, %s214
      %s216 = smul.u32 3, %s19
      %p217 = scmp.lt.s32.totalorder %s18, 1
      %s218 = scalar_select %p217, %s18, 1
      %p219 = scmp.lt.s32.totalorder %s216, 2
      %s220 = scalar_select %p219, %s216, 2
      %s221 = smul.addr %s218, 3
      %s222 = sadd.s32 %s220, %s221
      %s223 = smul.addr %s222, 4
      %s224 = scalar_lea.vmem %s0, %s223
      %s225 = smul.u32 3, %s19
      %p226 = scmp.lt.s32.totalorder %s18, 1
      %s227 = scalar_select %p226, %s18, 1
      %s228 = smul.addr %s227, 8
      %s229 = scalar_lea.vmem %s1, %s228
      %p230 = scmp.lt.s32.totalorder %s18, 1
      %s231 = scalar_select %p230, %s18, 1
      %s232 = smul.addr %s231, 8
      %s233 = scalar_lea.vmem %s2, %s232
      %s234 = smul.u32 3, %s19
      %p235 = scmp.lt.s32.totalorder %s18, 1
      %s236 = scalar_select %p235, %s18, 1
      %p237 = scmp.lt.s32.totalorder %s234, 2
      %s238 = scalar_select %p237, %s234, 2
      %s239 = smul.addr %s236, 3
      %s240 = sadd.s32 %s238, %s239
      %s241 = smul.addr %s240, 8
      %s242 = scalar_lea.vmem %s3, %s241
      %s243 = smul.u32 3, %s19
      %v244 = vld [vmem:[%s224] sm:$0xff]
      %v245 = vld [vmem:[%s224 + $0x8] sm:$0xf]
      %v246 = vunpack.c.l.bf16 %v244
      %v247 = vunpack.c.h.bf16 %v244
      %v248 = vunpack.c.l.bf16 %v245
      %v249 = vld [vmem:[%s229] sm:$0xff]
      %251 = vset.pattern.permute.xlu0 0
      %252 = vperm.xlu0 %251, %v249
      %v253 = vpop.permute.xlu0 %252
      %v255 = vmul.f32 %v246, %v253
      %v256 = vmul.f32 %v247, %v253
      %v257 = vmul.f32 %v248, %v253
      %v258 = vld [vmem:[%s233] sm:$0xff]
      %260 = vset.pattern.permute.xlu0 0
      %261 = vperm.xlu0 %260, %v258
      %v262 = vpop.permute.xlu0 %261
      %v264 = vadd.f32 %v255, %v262
      %v265 = vadd.f32 %v256, %v262
      %v266 = vadd.f32 %v257, %v262
      %v267 = vmax.f32 %v264, 0.0
      %v268 = vmax.f32 %v265, 0.0
      %v269 = vmax.f32 %v266, 0.0
      %270 = vst [vmem:[%s242] sm:$0xff] %v267
      %271 = vst [vmem:[%s242 + $0x8] sm:$0xff] %v268
      %vm272 = vcmask 261120
      %273 = vst.msk [vmem:[%s242 + $0x10] sm:$0xff] %vm272, %v269
      %s274 = smul.u32 3, %s19
      %p275 = scmp.lt.s32.totalorder %s18, 1
      %s276 = scalar_select %p275, %s18, 1
      %p277 = scmp.lt.s32.totalorder %s274, 2
      %s278 = scalar_select %p277, %s274, 2
      %s279 = smul.addr %s276, 3
      %s280 = sadd.s32 %s278, %s279
      %s281 = smul.addr %s280, 8
      %s282 = scalar_lea.vmem %s3, %s281
      // Predicated region
      $region33: #{conv_inst_relu.3} parent=31 // pred_check
        %p283 = pneg %p126
      $region34: #{conv_inst_relu.3} parent=31 // pred_check_branch
        %285 = sbr.rel (%p283) target = $region36
      $region35: #{conv_inst_relu.3} parent=31 // pred_region
        %s286 = smul.u32 3, %s19
      $region36: #{conv_inst_relu.3} parent=31 // pred_fallthru
        _
    $region32: #{conv_inst_relu.3} parent=5 // pred_fallthru
      _
    %p287 = scmp.le.s32.totalorder 2, %s9
    // Predicated region
    $region37: #{conv_inst_relu.3} parent=5 // pred_check
      %p288 = pneg %p287
    $region38: #{conv_inst_relu.3} parent=5 // pred_check_branch
      %290 = sbr.rel (%p288) target = $region40
    $region39: #{conv_inst_relu.3} parent=5 // pred_region
      %s291 = ssub.s32 %s9, 2
      // Predicated region
      $region41: #{conv_inst_relu.3} parent=39 // pred_check
        %p292 = pneg %p132
      $region42: #{conv_inst_relu.3} parent=39 // pred_check_branch
        %294 = sbr.rel (%p292) target = $region44
      $region43: #{conv_inst_relu.3} parent=39 // pred_region
        %s295 = smul.u32 3, %s21
        %p296 = scmp.lt.s32.totalorder %s20, 1
        %s297 = scalar_select %p296, %s20, 1
        %p298 = scmp.lt.s32.totalorder %s295, 2
        %s299 = scalar_select %p298, %s295, 2
        %s300 = smul.addr %s297, 3
        %s301 = sadd.s32 %s299, %s300
        %s302 = smul.addr %s301, 8
        %s303 = scalar_lea.vmem %s3, %s302
      $region44: #{conv_inst_relu.3} parent=39 // pred_fallthru
        _
    $region40: #{conv_inst_relu.3} parent=5 // pred_fallthru
      _
  $region6: #{conv_inst_relu.3} parent=0 // loop_footer
    %s13 = sadd.s32 1, %s9
  $region7: #{conv_inst_relu.3} parent=0 // loop_footer_branch
    %8 = sbr.rel target = $region3
  $region8: #{conv_inst_relu.3} parent=0 // loop_exit
    _

// kernel: conv_inst_relu.2
$region0: #{conv_inst_relu.2}
  #allocation0 [shape = 'u32[]', space=smem, size = 0x4, offset = 0x4, fixed_abs, tag = 'smem constant byte address 0x4 - core index']
  #allocation1 [shape = 'u32[144,128]{1,0:T(1,128)}', space=vmem, size = 0x12000, scoped, tag = 'internal scratch']
  %s0 = inlined_call_operand.vmem [shape: bf16[2,16,326], index: 0, kind: input, shape index: {}]
  %s1 = inlined_call_operand.vmem [shape: bf16[8,144], index: 1, kind: input, shape index: {}]
  %s2 = inlined_call_operand.vmem [shape: f32[1,1,288], index: 2, kind: input, shape index: {}]
  %s3 = inlined_call_operand.vmem [shape: bf16[2,8,288], index: 3, kind: output, shape index: {0}]
  %s4 = inlined_call_operand.vmem [shape: f32[2,1,8,2], index: 4, kind: output, shape index: {1}]
  %5 = xla_tuple %s3, %s4
  %s6 = sld [smem:[#allocation0]]
  $region53: #{conv_inst_relu.2} parent=0
    _
  %s8 = ssub.s32 1, %s6
  %s9 = scalar_select 0, %s8, %s6
  loop: start=0, step=1, limit=4
  $region2: #{conv_inst_relu.2} parent=0 // loop_pre_header
    _
  $region3: #{conv_inst_relu.2} parent=0 // loop_header
    %s11 = sphi 0, %s15
    %p12 = scmp.ge.s32.totalorder %s11, 4
    %s18 = sphi 0, %s30
    %s19 = sphi 0, %s26
    %s20 = sphi 0, %s18
    %s21 = sphi 0, %s19
    %s22 = sphi 0, %s20
    %s23 = sphi 0, %s21
    %s33 = sphi 0, %s35
    %s36 = sphi 0, %s33
    %s37 = sphi 0, %s36
    %s53 = sphi 0, %s37
    %s57 = sphi 0, %s57
    %s59 = sphi 0, %s57
    %s60 = sphi 0, %s59
    %s74 = sphi 0, %s60
    %s80 = sphi 0, %s82
    %s83 = sphi 0, %s80
    %s84 = sphi 0, %s83
    %s100 = sphi 0, %s84
    %s108 = sphi 0, %s110
    %s111 = sphi 0, %s108
    %s112 = sphi 0, %s111
    %s128 = sphi 0, %s112
    %s136 = sphi 0, %s138
    %s139 = sphi 0, %s136
    %s140 = sphi 0, %s139
    %s156 = sphi 0, %s140
  $region4: #{conv_inst_relu.2} parent=0 // loop_header_branch
    %14 = sbr.rel (%p12) target = $region8
  $region5: #{conv_inst_relu.2} parent=0 // loop_body
    %s16 = ssub.s32 %s11, 1
    %s17 = ssub.s32 %s11, 2
    %s24 = sadd.s32 1, %s19
    %p25 = scmp.ge.s32.totalorder %s24, 1
    %s26 = scalar_select %p25, 0, %s24
    %s27 = sadd.s32 1, %s18
    %s28 = scalar_select %p25, %s27, %s18
    %p29 = scmp.ge.s32.totalorder %s28, 2
    %s30 = scalar_select %p29, 0, %s28
    %s31 = ssub.s32 %s18, %s30
    %p32 = scmp.eq.s32.totalorder %s31, 0
    %s34 = sadd.s32 %s33, 1
    %s35 = scalar_select %p32, %s33, %s34
    %p38 = pneg %p32
    %p39 = scmp.eq.s32.totalorder %s11, 1
    %p40 = por %p38, %p39
    %p41 = scmp.ne.s32.totalorder %s33, %s36
    %p42 = scmp.eq.s32.totalorder %s11, 0
    %p43 = por %p41, %p42
    %p44 = scmp.ne.s32.totalorder %s33, %s36
    %p45 = scmp.eq.s32.totalorder %s16, 1
    %p46 = por %p44, %p45
    %p47 = scmp.ne.s32.totalorder %s36, %s37
    %p48 = scmp.eq.s32.totalorder %s16, 0
    %p49 = por %p47, %p48
    %p50 = scmp.ne.s32.totalorder %s36, %s37
    %p51 = scmp.eq.s32.totalorder %s17, 1
    %p52 = por %p50, %p51
    %p54 = scmp.ne.s32.totalorder %s37, %s53
    %p55 = scmp.eq.s32.totalorder %s17, 0
    %p56 = por %p54, %p55
    %s58 = sadd.s32 %s57, 1
    %p61 = scmp.eq.s32.totalorder %s11, 1
    %p62 = scmp.ne.s32.totalorder %s57, %s59
    %p63 = scmp.eq.s32.totalorder %s11, 0
    %p64 = por %p62, %p63
    %p65 = scmp.ne.s32.totalorder %s57, %s59
    %p66 = scmp.eq.s32.totalorder %s16, 1
    %p67 = por %p65, %p66
    %p68 = scmp.ne.s32.totalorder %s59, %s60
    %p69 = scmp.eq.s32.totalorder %s16, 0
    %p70 = por %p68, %p69
    %p71 = scmp.ne.s32.totalorder %s59, %s60
    %p72 = scmp.eq.s32.totalorder %s17, 1
    %p73 = por %p71, %p72
    %p75 = scmp.ne.s32.totalorder %s60, %s74
    %p76 = scmp.eq.s32.totalorder %s17, 0
    %p77 = por %p75, %p76
    %s78 = ssub.s32 %s19, %s26
    %p79 = scmp.eq.s32.totalorder %s78, 0
    %s81 = sadd.s32 %s80, 1
    %s82 = scalar_select %p79, %s80, %s81
    %p85 = pneg %p79
    %p86 = scmp.eq.s32.totalorder %s11, 1
    %p87 = por %p85, %p86
    %p88 = scmp.ne.s32.totalorder %s80, %s83
    %p89 = scmp.eq.s32.totalorder %s11, 0
    %p90 = por %p88, %p89
    %p91 = scmp.ne.s32.totalorder %s80, %s83
    %p92 = scmp.eq.s32.totalorder %s16, 1
    %p93 = por %p91, %p92
    %p94 = scmp.ne.s32.totalorder %s83, %s84
    %p95 = scmp.eq.s32.totalorder %s16, 0
    %p96 = por %p94, %p95
    %p97 = scmp.ne.s32.totalorder %s83, %s84
    %p98 = scmp.eq.s32.totalorder %s17, 1
    %p99 = por %p97, %p98
    %p101 = scmp.ne.s32.totalorder %s84, %s100
    %p102 = scmp.eq.s32.totalorder %s17, 0
    %p103 = por %p101, %p102
    %s104 = ssub.s32 %s18, %s30
    %s105 = ssub.s32 %s19, %s26
    %s106 = sor.u32 %s104, %s105
    %p107 = scmp.eq.s32.totalorder %s106, 0
    %s109 = sadd.s32 %s108, 1
    %s110 = scalar_select %p107, %s108, %s109
    %p113 = pneg %p107
    %p114 = scmp.eq.s32.totalorder %s11, 1
    %p115 = por %p113, %p114
    %p116 = scmp.ne.s32.totalorder %s108, %s111
    %p117 = scmp.eq.s32.totalorder %s11, 0
    %p118 = por %p116, %p117
    %p119 = scmp.ne.s32.totalorder %s108, %s111
    %p120 = scmp.eq.s32.totalorder %s16, 1
    %p121 = por %p119, %p120
    %p122 = scmp.ne.s32.totalorder %s111, %s112
    %p123 = scmp.eq.s32.totalorder %s16, 0
    %p124 = por %p122, %p123
    %p125 = scmp.ne.s32.totalorder %s111, %s112
    %p126 = scmp.eq.s32.totalorder %s17, 1
    %p127 = por %p125, %p126
    %p129 = scmp.ne.s32.totalorder %s112, %s128
    %p130 = scmp.eq.s32.totalorder %s17, 0
    %p131 = por %p129, %p130
    %s132 = ssub.s32 %s18, %s30
    %s133 = ssub.s32 %s19, %s26
    %s134 = sor.u32 %s132, %s133
    %p135 = scmp.eq.s32.totalorder %s134, 0
    %s137 = sadd.s32 %s136, 1
    %s138 = scalar_select %p135, %s136, %s137
    %p141 = pneg %p135
    %p142 = scmp.eq.s32.totalorder %s11, 1
    %p143 = por %p141, %p142
    %p144 = scmp.ne.s32.totalorder %s136, %s139
    %p145 = scmp.eq.s32.totalorder %s11, 0
    %p146 = por %p144, %p145
    %p147 = scmp.ne.s32.totalorder %s136, %s139
    %p148 = scmp.eq.s32.totalorder %s16, 1
    %p149 = por %p147, %p148
    %p150 = scmp.ne.s32.totalorder %s139, %s140
    %p151 = scmp.eq.s32.totalorder %s16, 0
    %p152 = por %p150, %p151
    %p153 = scmp.ne.s32.totalorder %s139, %s140
    %p154 = scmp.eq.s32.totalorder %s17, 1
    %p155 = por %p153, %p154
    %p157 = scmp.ne.s32.totalorder %s140, %s156
    %p158 = scmp.eq.s32.totalorder %s17, 0
    %p159 = por %p157, %p158
    %p160 = scmp.le.s32.totalorder 1, %s11
    %p161 = scmp.lt.s32.totalorder %s11, 3
    %p162 = pnand %p160, %p161
    %p163 = pneg %p162
    // Predicated region
    $region9: #{conv_inst_relu.2} parent=5 // pred_check
      _
    $region10: #{conv_inst_relu.2} parent=5 // pred_check_branch
      %165 = sbr.rel (%p162) target = $region12
    $region11: #{conv_inst_relu.2} parent=5 // pred_region
      %s166 = ssub.s32 %s11, 1
      // Predicated region
      $region13: #{conv_inst_relu.2} parent=11 // pred_check
        %p167 = pneg %p70
      $region14: #{conv_inst_relu.2} parent=11 // pred_check_branch
        %169 = sbr.rel (%p167) target = $region16
      $region15: #{conv_inst_relu.2} parent=11 // pred_region
        _
      $region16: #{conv_inst_relu.2} parent=11 // pred_fallthru
        _
      // Predicated region
      $region17: #{conv_inst_relu.2} parent=11 // pred_check
        %p170 = pneg %p96
      $region18: #{conv_inst_relu.2} parent=11 // pred_check_branch
        %172 = sbr.rel (%p170) target = $region20
      $region19: #{conv_inst_relu.2} parent=11 // pred_region
        %p173 = scmp.lt.s32.totalorder %s21, 0
        %s174 = scalar_select %p173, %s21, 0
        %s175 = smul.addr %s174, 3
        %s176 = scalar_lea.vmem %s2, %s175
      $region20: #{conv_inst_relu.2} parent=11 // pred_fallthru
        _
    $region12: #{conv_inst_relu.2} parent=5 // pred_fallthru
      _
    %p177 = scmp.lt.s32.totalorder %s11, 2
    // Predicated region
    $region21: #{conv_inst_relu.2} parent=5 // pred_check
      %p178 = pneg %p177
    $region22: #{conv_inst_relu.2} parent=5 // pred_check_branch
      %180 = sbr.rel (%p178) target = $region24
    $region23: #{conv_inst_relu.2} parent=5 // pred_region
      // Predicated region
      $region25: #{conv_inst_relu.2} parent=23 // pred_check
        %p181 = pneg %p43
      $region26: #{conv_inst_relu.2} parent=23 // pred_check_branch
        %183 = sbr.rel (%p181) target = $region28
      $region27: #{conv_inst_relu.2} parent=23 // pred_region
        %p184 = scmp.lt.s32.totalorder %s18, 1
        %s185 = scalar_select %p184, %s18, 1
        %s186 = smul.addr %s185, 6
        %s187 = smul.addr %s186, 4
        %s188 = scalar_lea.vmem %s0, %s187
      $region28: #{conv_inst_relu.2} parent=23 // pred_fallthru
        _
    $region24: #{conv_inst_relu.2} parent=5 // pred_fallthru
      _
    %p189 = scmp.le.s32.totalorder 1, %s11
    %p190 = scmp.lt.s32.totalorder %s11, 3
    %p191 = pnand %p189, %p190
    %p192 = pneg %p191
    // Predicated region
    $region29: #{conv_inst_relu.2} parent=5 // pred_check
      _
    $region30: #{conv_inst_relu.2} parent=5 // pred_check_branch
      %194 = sbr.rel (%p191) target = $region32
    $region31: #{conv_inst_relu.2} parent=5 // pred_region
      %s195 = ssub.s32 %s11, 1
      %p196 = scmp.lt.s32.totalorder %s20, 1
      %s197 = scalar_select %p196, %s20, 1
      %s198 = smul.addr %s197, 6
      %s199 = smul.addr %s198, 4
      %s200 = scalar_lea.vmem %s0, %s199
      %p201 = pneg %p49
      %p202 = pneg %p46
      %p203 = pneg %p70
      %p204 = pneg %p67
      %p205 = scmp.lt.s32.totalorder %s21, 0
      %s206 = scalar_select %p205, %s21, 0
      %s207 = smul.addr %s206, 3
      %s208 = scalar_lea.vmem %s2, %s207
      %p209 = pneg %p96
      %p210 = pneg %p93
      %p211 = pneg %p124
      %p212 = pneg %p121
      %s213 = smul.u32 3, %s21
      %p214 = scmp.lt.s32.totalorder %s20, 1
      %s215 = scalar_select %p214, %s20, 1
      %p216 = scmp.lt.s32.totalorder %s213, 2
      %s217 = scalar_select %p216, %s213, 2
      %s218 = smul.addr %s215, 3
      %s219 = sadd.s32 %s217, %s218
      %s220 = smul.addr %s219, 4
      %s221 = scalar_lea.vmem %s3, %s220
      %p222 = pneg %p152
      %p223 = pneg %p149
      %p224 = scmp.lt.s32.totalorder %s20, 1
      %s225 = scalar_select %p224, %s20, 1
      %p226 = scmp.lt.s32.totalorder %s21, 0
      %s227 = scalar_select %p226, %s21, 0
      %s228 = sadd.s32 %s227, %s225
      %s229 = smul.addr %s228, 8
      %s230 = scalar_lea.vmem %s4, %s229
      %p231 = scmp.lt.s32.totalorder %s20, 1
      %s232 = scalar_select %p231, %s20, 1
      %s233 = smul.addr %s232, 6
      %s234 = smul.addr %s233, 4
      %s235 = scalar_lea.vmem %s0, %s234
      %p236 = scmp.lt.s32.totalorder %s21, 0
      %s237 = scalar_select %p236, %s21, 0
      %s238 = smul.addr %s237, 3
      %s239 = scalar_lea.vmem %s2, %s238
      %s240 = smul.u32 3, %s21
      %p241 = scmp.lt.s32.totalorder %s20, 1
      %s242 = scalar_select %p241, %s20, 1
      %p243 = scmp.lt.s32.totalorder %s240, 2
      %s244 = scalar_select %p243, %s240, 2
      %s245 = smul.addr %s242, 3
      %s246 = sadd.s32 %s244, %s245
      %s247 = smul.addr %s246, 4
      %s248 = scalar_lea.vmem %s3, %s247
      %s249 = smul.u32 3, %s21
      %p250 = scmp.lt.s32.totalorder %s20, 1
      %s251 = scalar_select %p250, %s20, 1
      %p252 = scmp.lt.s32.totalorder %s21, 0
      %s253 = scalar_select %p252, %s21, 0
      %s254 = sadd.s32 %s253, %s251
      %s255 = smul.addr %s254, 8
      %s256 = scalar_lea.vmem %s4, %s255
      %v258 = vld [vmem:[%s235] sm:$0xff]
      %v259 = vld [vmem:[%s235 + $0x8] sm:$0xf]
      %v260 = vld [vmem:[%s235 + $0xc] sm:$0xff]
      %v261 = vld [vmem:[%s235 + $0x14] sm:$0xf]
      %v266 = vunpack.c.l.b16 %v258
      %v267 = vunpack.c.h.b16 %v258
      %v268 = vunpack.c.l.b16 %v259
      %v269 = vunpack.c.l.b16 %v260
      %v270 = vunpack.c.h.b16 %v260
      %v271 = vunpack.c.l.b16 %v261
      %v272 = vpack.c.b16 %v269, %v266
      %v273 = vpack.c.b16 %v270, %v267
      %v274 = vpack.c.b16 %v271, %v268
      %278 = vrot.lane.b32.xlu0 %v272, 127
      %v279 = vpop.permute.xlu0 %278
      %280 = vrot.lane.b32.xlu0 %v273, 127
      %v281 = vpop.permute.xlu0 %280
      %282 = vrot.lane.b32.xlu0 %v274, 127
      %v283 = vpop.permute.xlu0 %282
      %vm284 = vcmask 1039360
      %v285 = vsel %vm284, %v279, %v281
      %v286 = vsel %vm284, %v281, %v283
      %290 = vrot.lane.b32.xlu0 %v272, 126
      %v291 = vpop.permute.xlu0 %290
      %292 = vrot.lane.b32.xlu0 %v273, 126
      %v293 = vpop.permute.xlu0 %292
      %294 = vrot.lane.b32.xlu0 %v274, 126
      %v295 = vpop.permute.xlu0 %294
      %vm296 = vcmask 1031168
      %v297 = vsel %vm296, %v291, %v293
      %v298 = vsel %vm296, %v293, %v295
      %302 = vrot.lane.b32.xlu0 %v272, 110
      %v303 = vpop.permute.xlu0 %302
      %304 = vrot.lane.b32.xlu0 %v273, 110
      %v305 = vpop.permute.xlu0 %304
      %306 = vrot.lane.b32.xlu0 %v274, 110
      %v307 = vpop.permute.xlu0 %306
      %vm308 = vcmask 900096
      %v309 = vsel %vm308, %v303, %v305
      %v310 = vsel %vm308, %v305, %v307
      %314 = vrot.lane.b32.xlu0 %v272, 109
      %v315 = vpop.permute.xlu0 %314
      %316 = vrot.lane.b32.xlu0 %v273, 109
      %v317 = vpop.permute.xlu0 %316
      %318 = vrot.lane.b32.xlu0 %v274, 109
      %v319 = vpop.permute.xlu0 %318
      %vm320 = vcmask 891904
      %v321 = vsel %vm320, %v315, %v317
      %v322 = vsel %vm320, %v317, %v319
      %326 = vrot.lane.b32.xlu0 %v272, 108
      %v327 = vpop.permute.xlu0 %326
      %328 = vrot.lane.b32.xlu0 %v273, 108
      %v329 = vpop.permute.xlu0 %328
      %330 = vrot.lane.b32.xlu0 %v274, 108
      %v331 = vpop.permute.xlu0 %330
      %vm332 = vcmask 883712
      %v333 = vsel %vm332, %v327, %v329
      %v334 = vsel %vm332, %v329, %v331
      %338 = vrot.lane.b32.xlu0 %v272, 92
      %v339 = vpop.permute.xlu0 %338
      %340 = vrot.lane.b32.xlu0 %v273, 92
      %v341 = vpop.permute.xlu0 %340
      %342 = vrot.lane.b32.xlu0 %v274, 92
      %v343 = vpop.permute.xlu0 %342
      %vm344 = vcmask 752640
      %v345 = vsel %vm344, %v339, %v341
      %v346 = vsel %vm344, %v341, %v343
      %350 = vrot.lane.b32.xlu0 %v272, 91
      %v351 = vpop.permute.xlu0 %350
      %352 = vrot.lane.b32.xlu0 %v273, 91
      %v353 = vpop.permute.xlu0 %352
      %354 = vrot.lane.b32.xlu0 %v274, 91
      %v355 = vpop.permute.xlu0 %354
      %vm356 = vcmask 744448
      %v357 = vsel %vm356, %v351, %v353
      %v358 = vsel %vm356, %v353, %v355
      %362 = vrot.lane.b32.xlu0 %v272, 90
      %v363 = vpop.permute.xlu0 %362
      %364 = vrot.lane.b32.xlu0 %v273, 90
      %v365 = vpop.permute.xlu0 %364
      %366 = vrot.lane.b32.xlu0 %v274, 90
      %v367 = vpop.permute.xlu0 %366
      %vm368 = vcmask 736256
      %v369 = vsel %vm368, %v363, %v365
      %v370 = vsel %vm368, %v365, %v367
      %v374 = vld [vmem:[%s1] sm:$0xff]
      %v376 = vunpack.c.l.b16 %v374
      %v377 = vunpack.c.h.b16 %v374
      %v378 = vpack.c.b16 %v376, %v376
      %v379 = vpack.c.b16 %v377, %v377
      %vm381 = vcmask 130048
      %v383 = vsel %vm381, %v379, 0
      %385 = vmatprep.subr.bf16.mxu0 %v358
      %386 = vmatpush1.bf16.msra.mxu0 %v357
      %387 = vmatprep.subr.bf16.mxu0 %v346
      %388 = vmatpush1.bf16.msra.mxu0 %v345
      %389 = vmatprep.subr.bf16.mxu0 %v334
      %390 = vmatpush1.bf16.msra.mxu0 %v333
      %391 = vmatprep.subr.bf16.mxu0 %v322
      %392 = vmatpush1.bf16.msra.mxu0 %v321
      %393 = vmatprep.subr.bf16.mxu0 %v310
      %394 = vmatpush1.bf16.msra.mxu0 %v309
      %395 = vmatprep.subr.bf16.mxu0 %v298
      %396 = vmatpush1.bf16.msra.mxu0 %v297
      %397 = vmatprep.subr.bf16.mxu0 %v286
      %398 = vmatpush1.bf16.msra.mxu0 %v285
      %399 = vmatprep.subr.bf16.mxu0 %v273
      %400 = vmatpush1.bf16.msra.mxu0 %v272
      %401 = vmatprep.subr.bf16.mxu0 0
      %402 = vmatpush2.bf16.msra.mxu0 0
      %403 = vmatprep.subr.bf16.mxu0 0
      %404 = vmatpush2.bf16.msra.mxu0 0
      %405 = vmatprep.subr.bf16.mxu0 0
      %406 = vmatpush2.bf16.msra.mxu0 0
      %407 = vmatprep.subr.bf16.mxu0 0
      %408 = vmatpush2.bf16.msra.mxu0 0
      %409 = vmatprep.subr.bf16.mxu0 0
      %410 = vmatpush2.bf16.msra.mxu0 0
      %411 = vmatprep.subr.bf16.mxu0 0
      %412 = vmatpush2.bf16.msra.mxu0 0
      %413 = vmatprep.subr.bf16.mxu0 0
      %414 = vmatpush2.bf16.msra.mxu0 0
      %415 = vmatprep.subr.bf16.mxu0 %v370
      %416 = vmatpush2.bf16.msra.mxu0 %v369
      %417 = vmatprep.mubr.bf16.mxu0 %v383
      %418 = vmatmul.mubr.bf16.gmra.mxu0 %v378
      %v419 = vpop.f32.mrf.mxu0
      %v420 = vadd.f32 0.0, %v419
      %v421 = vpop.f32.mrf.mxu0
      %v422 = vadd.f32 0.0, %v421
      %v423 = vpop.f32.mrf.mxu0
      %v424 = vpop.f32.mrf.mxu0
      %425 = vdwg.mxu0
      %426 = vmatprep.subr.bf16.mxu0 0
      %427 = vmatpush1.bf16.msra.mxu0 %v355
      %428 = vmatprep.subr.bf16.mxu0 0
      %429 = vmatpush1.bf16.msra.mxu0 %v343
      %430 = vmatprep.subr.bf16.mxu0 0
      %431 = vmatpush1.bf16.msra.mxu0 %v331
      %432 = vmatprep.subr.bf16.mxu0 0
      %433 = vmatpush1.bf16.msra.mxu0 %v319
      %434 = vmatprep.subr.bf16.mxu0 0
      %435 = vmatpush1.bf16.msra.mxu0 %v307
      %436 = vmatprep.subr.bf16.mxu0 0
      %437 = vmatpush1.bf16.msra.mxu0 %v295
      %438 = vmatprep.subr.bf16.mxu0 0
      %439 = vmatpush1.bf16.msra.mxu0 %v283
      %440 = vmatprep.subr.bf16.mxu0 0
      %441 = vmatpush1.bf16.msra.mxu0 %v274
      %442 = vmatprep.subr.bf16.mxu0 0
      %443 = vmatpush2.bf16.msra.mxu0 0
      %444 = vmatprep.subr.bf16.mxu0 0
      %445 = vmatpush2.bf16.msra.mxu0 0
      %446 = vmatprep.subr.bf16.mxu0 0
      %447 = vmatpush2.bf16.msra.mxu0 0
      %448 = vmatprep.subr.bf16.mxu0 0
      %449 = vmatpush2.bf16.msra.mxu0 0
      %450 = vmatprep.subr.bf16.mxu0 0
      %451 = vmatpush2.bf16.msra.mxu0 0
      %452 = vmatprep.subr.bf16.mxu0 0
      %453 = vmatpush2.bf16.msra.mxu0 0
      %454 = vmatprep.subr.bf16.mxu0 0
      %455 = vmatpush2.bf16.msra.mxu0 0
      %456 = vmatprep.subr.bf16.mxu0 0
      %457 = vmatpush2.bf16.msra.mxu0 %v367
      %458 = vmatprep.mubr.bf16.mxu0 %v383
      %459 = vmatmul.mubr.bf16.gmra.mxu0 %v378
      %v460 = vpop.f32.mrf.mxu0
      %v461 = vadd.f32 0.0, %v460
      %v462 = vpop.f32.mrf.mxu0
      %v463 = vpop.f32.mrf.mxu0
      %v464 = vpop.f32.mrf.mxu0
      %465 = vdwg.mxu0
      %v466 = vpack.c.bf16 %v420, %v420
      %v467 = vpack.c.bf16 %v422, %v422
      %v468 = vpack.c.bf16 %v461, %v461
      %v472 = vunpack.c.l.b16 %v466
      %v473 = vunpack.c.l.b16 %v467
      %v474 = vunpack.c.l.b16 %v468
      %v475 = vpack.c.b16 %v473, %v472
      %v476 = vpack.c.b16 %v474, %v474
      %479 = vst [vmem:[%s248] sm:$0xff] %v475
      %vm480 = vcmask 257024
      %481 = vst.msk [vmem:[%s248 + $0x8] sm:$0xf] %vm480, %v476
      %v482 = vld [vmem:[%s239] sm:$0x7]
      %v484 = vlaneseq
      %v485 = vshrl.u32 %v484, 7
      %v486 = vsub.s32 0, %v485
      %v487 = vrot.slane %v482, %v486
      %v488 = vlaneseq
      %v489 = vshrl.u32 %v488, 7
      %v490 = vsub.s32 1, %v489
      %v491 = vrot.slane %v482, %v490
      %v492 = vlaneseq
      %v493 = vshrl.u32 %v492, 7
      %v494 = vsub.s32 2, %v493
      %v495 = vrot.slane %v482, %v494
      %v499 = vmul.f32 %v420, %v487
      %v500 = vmul.f32 %v422, %v491
      %v501 = vmul.f32 %v461, %v495
      %v502 = vadd.f32 %v499, %v500
      %vm503 = vcmask 261120
      %v504 = vsel %vm503, %v501, 0.0
      %v505 = vadd.f32 %v502, %v504
      %506 = vadd.xlane.f32.xlu0 %v505
      %v507 = vpop.xlane.xlu0 %506
      %v508 = vmul.f32 %v499, %v499
      %v509 = vmul.f32 %v500, %v500
      %v510 = vmul.f32 %v501, %v501
      %v511 = vadd.f32 %v508, %v509
      %v512 = vsel %vm503, %v510, 0.0
      %v513 = vadd.f32 %v511, %v512
      %514 = vadd.xlane.f32.xlu0 %v513
      %v515 = vpop.xlane.xlu0 %514
      %vm516 = vcmask 7168
      %v517 = vsel %vm516, %v507, %v515
      %vm518 = vcmask 15360
      %519 = vst.msk [vmem:[%s256] sm:$0xff] %vm518, %v517
      %s520 = smul.u32 3, %s21
      %p521 = scmp.lt.s32.totalorder %s20, 1
      %s522 = scalar_select %p521, %s20, 1
      %p523 = scmp.lt.s32.totalorder %s520, 2
      %s524 = scalar_select %p523, %s520, 2
      %s525 = smul.addr %s522, 3
      %s526 = sadd.s32 %s524, %s525
      %s527 = smul.addr %s526, 4
      %s528 = scalar_lea.vmem %s3, %s527
      %p529 = scmp.lt.s32.totalorder %s20, 1
      %s530 = scalar_select %p529, %s20, 1
      %p531 = scmp.lt.s32.totalorder %s21, 0
      %s532 = scalar_select %p531, %s21, 0
      %s533 = sadd.s32 %s532, %s530
      %s534 = smul.addr %s533, 8
      %s535 = scalar_lea.vmem %s4, %s534
      // Predicated region
      $region33: #{conv_inst_relu.2} parent=31 // pred_check
        %p536 = pneg %p121
      $region34: #{conv_inst_relu.2} parent=31 // pred_check_branch
        %538 = sbr.rel (%p536) target = $region36
      $region35: #{conv_inst_relu.2} parent=31 // pred_region
        %s539 = smul.u32 3, %s21
      $region36: #{conv_inst_relu.2} parent=31 // pred_fallthru
        _
      // Predicated region
      $region37: #{conv_inst_relu.2} parent=31 // pred_check
        %p540 = pneg %p149
      $region38: #{conv_inst_relu.2} parent=31 // pred_check_branch
        %542 = sbr.rel (%p540) target = $region40
      $region39: #{conv_inst_relu.2} parent=31 // pred_region
        _
      $region40: #{conv_inst_relu.2} parent=31 // pred_fallthru
        _
    $region32: #{conv_inst_relu.2} parent=5 // pred_fallthru
      _
    %p543 = scmp.le.s32.totalorder 2, %s11
    // Predicated region
    $region41: #{conv_inst_relu.2} parent=5 // pred_check
      %p544 = pneg %p543
    $region42: #{conv_inst_relu.2} parent=5 // pred_check_branch
      %546 = sbr.rel (%p544) target = $region44
    $region43: #{conv_inst_relu.2} parent=5 // pred_region
      %s547 = ssub.s32 %s11, 2
      // Predicated region
      $region45: #{conv_inst_relu.2} parent=43 // pred_check
        %p548 = pneg %p127
      $region46: #{conv_inst_relu.2} parent=43 // pred_check_branch
        %550 = sbr.rel (%p548) target = $region48
      $region47: #{conv_inst_relu.2} parent=43 // pred_region
        %s551 = smul.u32 3, %s23
        %p552 = scmp.lt.s32.totalorder %s22, 1
        %s553 = scalar_select %p552, %s22, 1
        %p554 = scmp.lt.s32.totalorder %s551, 2
        %s555 = scalar_select %p554, %s551, 2
        %s556 = smul.addr %s553, 3
        %s557 = sadd.s32 %s555, %s556
        %s558 = smul.addr %s557, 4
        %s559 = scalar_lea.vmem %s3, %s558
      $region48: #{conv_inst_relu.2} parent=43 // pred_fallthru
        _
      // Predicated region
      $region49: #{conv_inst_relu.2} parent=43 // pred_check
        %p560 = pneg %p155
      $region50: #{conv_inst_relu.2} parent=43 // pred_check_branch
        %562 = sbr.rel (%p560) target = $region52
      $region51: #{conv_inst_relu.2} parent=43 // pred_region
        %p563 = scmp.lt.s32.totalorder %s22, 1
        %s564 = scalar_select %p563, %s22, 1
        %p565 = scmp.lt.s32.totalorder %s23, 0
        %s566 = scalar_select %p565, %s23, 0
        %s567 = sadd.s32 %s566, %s564
        %s568 = smul.addr %s567, 8
        %s569 = scalar_lea.vmem %s4, %s568
      $region52: #{conv_inst_relu.2} parent=43 // pred_fallthru
        _
    $region44: #{conv_inst_relu.2} parent=5 // pred_fallthru
      _
  $region6: #{conv_inst_relu.2} parent=0 // loop_footer
    %s15 = sadd.s32 1, %s11
  $region7: #{conv_inst_relu.2} parent=0 // loop_footer_branch
    %10 = sbr.rel target = $region3
  $region8: #{conv_inst_relu.2} parent=0 // loop_exit
    _

</llo_original>
